<compile_context>
chip_gen: v5e
topology: v5e:2x2
jax: 0.10.0
libtpu: 0.0.40
codegen_flags: <defaults>
</compile_context>

<pallas_src>
import jax
import jax.numpy as jnp
from jax.experimental import pallas as pl
from jax.experimental.pallas import tpu as pltpu

TILE_B = 2048   # batch rows per grid step (per-step VMEM is still only a few MB)


def _round_up(x, m):
    return ((x + m - 1) // m) * m


def _mlp_kernel(x_ref,
                w1_ref, b1_ref,
                w2_ref, b2_ref,
                w3_ref, b3_ref,
                w4_ref, b4_ref,
                o_ref):
    """Fused relu(fc1)->relu(fc2)->relu(fc3)->fc4.

    Matmuls take bf16 operands with f32 accumulation; bias/ReLU math is f32.
    """
    h = jnp.dot(x_ref[...], w1_ref[...],
                preferred_element_type=jnp.float32) + b1_ref[...]
    h = jnp.maximum(h, 0.0).astype(jnp.bfloat16)

    h = jnp.dot(h, w2_ref[...],
                preferred_element_type=jnp.float32) + b2_ref[...]
    h = jnp.maximum(h, 0.0).astype(jnp.bfloat16)

    h = jnp.dot(h, w3_ref[...],
                preferred_element_type=jnp.float32) + b3_ref[...]
    h = jnp.maximum(h, 0.0).astype(jnp.bfloat16)

    h = jnp.dot(h, w4_ref[...],
                preferred_element_type=jnp.float32) + b4_ref[...]
    o_ref[...] = h.astype(o_ref.dtype)


def init_params(key, obs_dim, action_dim):
    """PyTorch nn.Linear-style init (uniform in +-1/sqrt(fan_in)); f32 storage."""
    dims = [(obs_dim + action_dim, 64), (64, 128), (128, 64), (64, obs_dim)]
    params = {}
    for idx, (fan_in, fan_out) in enumerate(dims, start=1):
        key, kw, kb = jax.random.split(key, 3)
        bound = 1.0 / jnp.sqrt(jnp.float32(fan_in))
        params[f"w{idx}"] = jax.random.uniform(
            kw, (fan_in, fan_out), jnp.float32, minval=-bound, maxval=bound)
        # biases kept 2-D (1, fan_out) for a clean (sublane, lane) layout
        params[f"b{idx}"] = jax.random.uniform(
            kb, (1, fan_out), jnp.float32, minval=-bound, maxval=bound)
    return params


def dynamics_forward(obs, action, params):
    """obs: (B, obs_dim), action: (B, action_dim) -> (B, obs_dim) float32."""
    B, obs_dim = obs.shape
    _, act_dim = action.shape
    in_dim = obs_dim + act_dim

    # Single concatenated bf16 input (one K=in_dim matmul for fc1).
    x_b = jnp.concatenate([obs, action], axis=-1).astype(jnp.bfloat16)

    # bf16 matmul operands (kernel accumulates in f32); biases stay f32.
    w1 = params["w1"].astype(jnp.bfloat16)
    w2 = params["w2"].astype(jnp.bfloat16)
    w3 = params["w3"].astype(jnp.bfloat16)
    w4 = params["w4"].astype(jnp.bfloat16)
    b1, b2, b3, b4 = params["b1"], params["b2"], params["b3"], params["b4"]

    # Batch tiling: round up to 16 sublanes (bf16 packing), pick the largest
    # tile <= TILE_B that still yields >= 2 grid steps when possible (keeps
    # both v7x TensorCores busy), then pad the batch to a tile multiple.
    b16 = _round_up(B, 16)
    tile_b = max(16, min(TILE_B, _round_up(pl.cdiv(b16, 2), 16)))
    b_pad = _round_up(b16, tile_b)
    if b_pad != B:
        x_b = jnp.pad(x_b, ((0, b_pad - B), (0, 0)))
    n_blocks = b_pad // tile_b

    row_in_spec = pl.BlockSpec((tile_b, in_dim), lambda i: (i, 0))
    row_out_spec = pl.BlockSpec((tile_b, obs_dim), lambda i: (i, 0))
    pinned = lambda a: pl.BlockSpec(a.shape, lambda i: (0, 0))  # VMEM-resident

    flops = 2 * b_pad * (in_dim * 64 + 64 * 128 + 128 * 64 + 64 * obs_dim)
    bytes_accessed = (
        x_b.size * 2                                               # bf16 input
        + (w1.size + w2.size + w3.size + w4.size) * 2              # bf16 weights
        + (b1.size + b2.size + b3.size + b4.size) * 4              # f32 biases
        + b_pad * obs_dim * 4)                                     # f32 output

    out = pl.pallas_call(
        _mlp_kernel,
        out_shape=jax.ShapeDtypeStruct((b_pad, obs_dim), jnp.float32),
        grid=(n_blocks,),
        in_specs=[
            row_in_spec,
            pinned(w1), pinned(b1),
            pinned(w2), pinned(b2),
            pinned(w3), pinned(b3),
            pinned(w4), pinned(b4),
        ],
        out_specs=row_out_spec,
        compiler_params=pltpu.CompilerParams(
            dimension_semantics=("parallel",)),
        cost_estimate=pl.CostEstimate(
            flops=flops, bytes_accessed=bytes_accessed, transcendentals=0),
    )(x_b, w1, b1, w2, b2, w3, b3, w4, b4)

    return out[:B]


def reference_forward_f32(obs, action, params):
    """Pure-f32 reference (matches PyTorch module semantics)."""
    x = jnp.concatenate([obs, action], axis=-1).astype(jnp.float32)
    h = jnp.maximum(x @ params["w1"] + params["b1"], 0.0)
    h = jnp.maximum(h @ params["w2"] + params["b2"], 0.0)
    h = jnp.maximum(h @ params["w3"] + params["b3"], 0.0)
    return h @ params["w4"] + params["b4"]


def reference_forward_bf16(obs, action, params):
    """Plain-JAX reference with the same bf16-operand / f32-accum recipe."""
    def lin(h, w, b):
        return jnp.dot(h, w.astype(jnp.bfloat16),
                       preferred_element_type=jnp.float32) + b
    x = jnp.concatenate([obs, action], axis=-1).astype(jnp.bfloat16)
    h = jnp.maximum(lin(x, params["w1"], params["b1"]), 0.0).astype(jnp.bfloat16)
    h = jnp.maximum(lin(h, params["w2"], params["b2"]), 0.0).astype(jnp.bfloat16)
    h = jnp.maximum(lin(h, params["w3"], params["b3"]), 0.0).astype(jnp.bfloat16)
    return lin(h, params["w4"], params["b4"])


if __name__ == "__main__":
    obs_dim, action_dim, batch = 16, 8, 8

    key = jax.random.PRNGKey(0)
    k_obs, k_act, k_params = jax.random.split(key, 3)

    obs = jax.random.normal(k_obs, (batch, obs_dim), jnp.float32)
    action = jax.random.normal(k_act, (batch, action_dim), jnp.float32)
    params = init_params(k_params, obs_dim, action_dim)

    out = jax.block_until_ready(dynamics_forward(obs, action, params))
    assert out.shape == (batch, obs_dim)

    ref_lo = reference_forward_bf16(obs, action, params)   # same precision recipe
    ref_hi = reference_forward_f32(obs, action, params)    # PyTorch-f32 semantics
    assert jnp.allclose(out, ref_lo, atol=2e-3, rtol=2e-3), "mismatch vs bf16 reference"
    assert jnp.allclose(out, ref_hi, atol=5e-2, rtol=5e-2), "mismatch vs f32 reference"

    print("KERNEL_OK")
</pallas_src>

<mosaic_0001>
module attributes {stable_mosaic.version = 11 : i64} {
  func.func @_mlp_kernel(%arg0: i32, %arg1: memref<16x24xbf16, #tpu.memory_space<vmem>>, %arg2: memref<24x64xbf16, #tpu.memory_space<vmem>>, %arg3: memref<1x64xf32, #tpu.memory_space<vmem>>, %arg4: memref<64x128xbf16, #tpu.memory_space<vmem>>, %arg5: memref<1x128xf32, #tpu.memory_space<vmem>>, %arg6: memref<128x64xbf16, #tpu.memory_space<vmem>>, %arg7: memref<1x64xf32, #tpu.memory_space<vmem>>, %arg8: memref<64x16xbf16, #tpu.memory_space<vmem>>, %arg9: memref<1x16xf32, #tpu.memory_space<vmem>>, %arg10: memref<16x16xf32, #tpu.memory_space<vmem>>) attributes {dimension_semantics = [#tpu.dimension_semantics<parallel>], iteration_bounds = array<i64: 1>, scalar_prefetch = 0 : i64, scratch_operands = 0 : i64, tpu.core_type = #tpu.core_type<tc>, window_params = [{transform_indices = @transform_0, window_bounds = array<i64: 16, 24>}, {pipeline_mode = #tpu.pipeline_mode<synchronous>, transform_indices = @transform_1, window_bounds = array<i64: 24, 64>}, {pipeline_mode = #tpu.pipeline_mode<synchronous>, transform_indices = @transform_2, window_bounds = array<i64: 1, 64>}, {pipeline_mode = #tpu.pipeline_mode<synchronous>, transform_indices = @transform_3, window_bounds = array<i64: 64, 128>}, {pipeline_mode = #tpu.pipeline_mode<synchronous>, transform_indices = @transform_4, window_bounds = array<i64: 1, 128>}, {pipeline_mode = #tpu.pipeline_mode<synchronous>, transform_indices = @transform_5, window_bounds = array<i64: 128, 64>}, {pipeline_mode = #tpu.pipeline_mode<synchronous>, transform_indices = @transform_6, window_bounds = array<i64: 1, 64>}, {pipeline_mode = #tpu.pipeline_mode<synchronous>, transform_indices = @transform_7, window_bounds = array<i64: 64, 16>}, {pipeline_mode = #tpu.pipeline_mode<synchronous>, transform_indices = @transform_8, window_bounds = array<i64: 1, 16>}, {transform_indices = @transform_9, window_bounds = array<i64: 16, 16>}]} {
    %c0 = arith.constant 0 : index
    %c0_0 = arith.constant 0 : index
    %0 = vector.load %arg1[%c0, %c0_0] : memref<16x24xbf16, #tpu.memory_space<vmem>>, vector<16x24xbf16>
    %c0_1 = arith.constant 0 : index
    %c0_2 = arith.constant 0 : index
    %1 = vector.load %arg2[%c0_1, %c0_2] : memref<24x64xbf16, #tpu.memory_space<vmem>>, vector<24x64xbf16>
    %cst = arith.constant dense<0.000000e+00> : vector<16x64xf32>
    %2 = tpu.matmul %0, %1, %cst {dimension_numbers = #tpu.dot_dimension_numbers<[1], [0], [0], [1], [0, 0, 1, 1], [], []>} : vector<16x24xbf16>, vector<24x64xbf16>, vector<16x64xf32> -> vector<16x64xf32>
    %c0_3 = arith.constant 0 : index
    %c0_4 = arith.constant 0 : index
    %3 = vector.load %arg3[%c0_3, %c0_4] : memref<1x64xf32, #tpu.memory_space<vmem>>, vector<1x64xf32>
    %4 = vector.broadcast %3 : vector<1x64xf32> to vector<16x64xf32>
    %5 = arith.addf %2, %4 : vector<16x64xf32>
    %cst_5 = arith.constant 0.000000e+00 : f32
    %6 = vector.broadcast %cst_5 : f32 to vector<16x64xf32>
    %7 = arith.maximumf %5, %6 : vector<16x64xf32>
    %8 = arith.truncf %7 : vector<16x64xf32> to vector<16x64xbf16>
    %c0_6 = arith.constant 0 : index
    %c0_7 = arith.constant 0 : index
    %9 = vector.load %arg4[%c0_6, %c0_7] : memref<64x128xbf16, #tpu.memory_space<vmem>>, vector<64x128xbf16>
    %cst_8 = arith.constant dense<0.000000e+00> : vector<16x128xf32>
    %10 = tpu.matmul %8, %9, %cst_8 {dimension_numbers = #tpu.dot_dimension_numbers<[1], [0], [0], [1], [0, 0, 1, 1], [], []>} : vector<16x64xbf16>, vector<64x128xbf16>, vector<16x128xf32> -> vector<16x128xf32>
    %c0_9 = arith.constant 0 : index
    %c0_10 = arith.constant 0 : index
    %11 = vector.load %arg5[%c0_9, %c0_10] : memref<1x128xf32, #tpu.memory_space<vmem>>, vector<1x128xf32>
    %12 = vector.broadcast %11 : vector<1x128xf32> to vector<16x128xf32>
    %13 = arith.addf %10, %12 : vector<16x128xf32>
    %cst_11 = arith.constant 0.000000e+00 : f32
    %14 = vector.broadcast %cst_11 : f32 to vector<16x128xf32>
    %15 = arith.maximumf %13, %14 : vector<16x128xf32>
    %16 = arith.truncf %15 : vector<16x128xf32> to vector<16x128xbf16>
    %c0_12 = arith.constant 0 : index
    %c0_13 = arith.constant 0 : index
    %17 = vector.load %arg6[%c0_12, %c0_13] : memref<128x64xbf16, #tpu.memory_space<vmem>>, vector<128x64xbf16>
    %cst_14 = arith.constant dense<0.000000e+00> : vector<16x64xf32>
    %18 = tpu.matmul %16, %17, %cst_14 {dimension_numbers = #tpu.dot_dimension_numbers<[1], [0], [0], [1], [0, 0, 1, 1], [], []>} : vector<16x128xbf16>, vector<128x64xbf16>, vector<16x64xf32> -> vector<16x64xf32>
    %c0_15 = arith.constant 0 : index
    %c0_16 = arith.constant 0 : index
    %19 = vector.load %arg7[%c0_15, %c0_16] : memref<1x64xf32, #tpu.memory_space<vmem>>, vector<1x64xf32>
    %20 = vector.broadcast %19 : vector<1x64xf32> to vector<16x64xf32>
    %21 = arith.addf %18, %20 : vector<16x64xf32>
    %cst_17 = arith.constant 0.000000e+00 : f32
    %22 = vector.broadcast %cst_17 : f32 to vector<16x64xf32>
    %23 = arith.maximumf %21, %22 : vector<16x64xf32>
    %24 = arith.truncf %23 : vector<16x64xf32> to vector<16x64xbf16>
    %c0_18 = arith.constant 0 : index
    %c0_19 = arith.constant 0 : index
    %25 = vector.load %arg8[%c0_18, %c0_19] : memref<64x16xbf16, #tpu.memory_space<vmem>>, vector<64x16xbf16>
    %cst_20 = arith.constant dense<0.000000e+00> : vector<16x16xf32>
    %26 = tpu.matmul %24, %25, %cst_20 {dimension_numbers = #tpu.dot_dimension_numbers<[1], [0], [0], [1], [0, 0, 1, 1], [], []>} : vector<16x64xbf16>, vector<64x16xbf16>, vector<16x16xf32> -> vector<16x16xf32>
    %c0_21 = arith.constant 0 : index
    %c0_22 = arith.constant 0 : index
    %27 = vector.load %arg9[%c0_21, %c0_22] : memref<1x16xf32, #tpu.memory_space<vmem>>, vector<1x16xf32>
    %28 = vector.broadcast %27 : vector<1x16xf32> to vector<16x16xf32>
    %29 = arith.addf %26, %28 : vector<16x16xf32>
    %c0_23 = arith.constant 0 : index
    %c0_24 = arith.constant 0 : index
    %30 = vector.load %arg10[%c0_23, %c0_24] : memref<16x16xf32, #tpu.memory_space<vmem>>, vector<16x16xf32>
    tpu.vector_store %arg10[%c0_23, %c0_24], %29 {strides = array<i32>} : memref<16x16xf32, #tpu.memory_space<vmem>>, vector<16x16xf32>,
    return
  }
  func.func @transform_0(%arg0: i32) -> (i32, i32) {
    %c0_i32 = arith.constant 0 : i32
    %c0_i32_0 = arith.constant 0 : i32
    return %arg0, %c0_i32 : i32, i32
  }
  func.func @transform_1(%arg0: i32) -> (i32, i32) {
    %c0_i32 = arith.constant 0 : i32
    %c0_i32_0 = arith.constant 0 : i32
    %c0_i32_1 = arith.constant 0 : i32
    return %c0_i32, %c0_i32_0 : i32, i32
  }
  func.func @transform_2(%arg0: i32) -> (i32, i32) {
    %c0_i32 = arith.constant 0 : i32
    %c0_i32_0 = arith.constant 0 : i32
    %c0_i32_1 = arith.constant 0 : i32
    return %c0_i32, %c0_i32_0 : i32, i32
  }
  func.func @transform_3(%arg0: i32) -> (i32, i32) {
    %c0_i32 = arith.constant 0 : i32
    %c0_i32_0 = arith.constant 0 : i32
    %c0_i32_1 = arith.constant 0 : i32
    return %c0_i32, %c0_i32_0 : i32, i32
  }
  func.func @transform_4(%arg0: i32) -> (i32, i32) {
    %c0_i32 = arith.constant 0 : i32
    %c0_i32_0 = arith.constant 0 : i32
    %c0_i32_1 = arith.constant 0 : i32
    return %c0_i32, %c0_i32_0 : i32, i32
  }
  func.func @transform_5(%arg0: i32) -> (i32, i32) {
    %c0_i32 = arith.constant 0 : i32
    %c0_i32_0 = arith.constant 0 : i32
    %c0_i32_1 = arith.constant 0 : i32
    return %c0_i32, %c0_i32_0 : i32, i32
  }
  func.func @transform_6(%arg0: i32) -> (i32, i32) {
    %c0_i32 = arith.constant 0 : i32
    %c0_i32_0 = arith.constant 0 : i32
    %c0_i32_1 = arith.constant 0 : i32
    return %c0_i32, %c0_i32_0 : i32, i32
  }
  func.func @transform_7(%arg0: i32) -> (i32, i32) {
    %c0_i32 = arith.constant 0 : i32
    %c0_i32_0 = arith.constant 0 : i32
    %c0_i32_1 = arith.constant 0 : i32
    return %c0_i32, %c0_i32_0 : i32, i32
  }
  func.func @transform_8(%arg0: i32) -> (i32, i32) {
    %c0_i32 = arith.constant 0 : i32
    %c0_i32_0 = arith.constant 0 : i32
    %c0_i32_1 = arith.constant 0 : i32
    return %c0_i32, %c0_i32_0 : i32, i32
  }
  func.func @transform_9(%arg0: i32) -> (i32, i32) {
    %c0_i32 = arith.constant 0 : i32
    %c0_i32_0 = arith.constant 0 : i32
    return %arg0, %c0_i32 : i32, i32
  }
}

</mosaic_0001>

<llo_original>
// kernel: tpu_custom_call.1
$region0: #{tpu_custom_call.1}
  #allocation0 [shape = 'u32[]', space=smem, size = 0x4, offset = 0x4, fixed_abs, tag = 'smem constant byte address 0x4 - core index']
  #allocation1 [shape = 'u32[72,128]{1,0:T(1,128)}', space=vmem, size = 0x9000, scoped, tag = 'internal scratch']
  %s0 = inlined_call_operand.vmem [shape: bf16[16,24], index: 0, kind: input, shape index: {}]
  %s1 = inlined_call_operand.vmem [shape: bf16[24,64], index: 1, kind: input, shape index: {}]
  %s2 = inlined_call_operand.vmem [shape: f32[1,64], index: 2, kind: input, shape index: {}]
  %s3 = inlined_call_operand.vmem [shape: bf16[64,128], index: 3, kind: input, shape index: {}]
  %s4 = inlined_call_operand.vmem [shape: f32[1,128], index: 4, kind: input, shape index: {}]
  %s5 = inlined_call_operand.vmem [shape: bf16[128,64], index: 5, kind: input, shape index: {}]
  %s6 = inlined_call_operand.vmem [shape: f32[1,64], index: 6, kind: input, shape index: {}]
  %s7 = inlined_call_operand.vmem [shape: bf16[64,16], index: 7, kind: input, shape index: {}]
  %s8 = inlined_call_operand.vmem [shape: f32[1,16], index: 8, kind: input, shape index: {}]
  %s9 = inlined_call_operand.hbm [shape: f32[16,16], index: 9, kind: output, shape index: {}]
  %s10 = sld [smem:[#allocation0]]
  $region46: #{tpu_custom_call.1} parent=0
    _
  %s12 = ssub.s32 1, %s10
  %s13 = scalar_select 0, %s12, %s10
  $region1: #{tpu_custom_call.1} parent=0
    #allocation2 [shape = 'u8[8192]{0}', space=vmem, size = 0x2000, scoped, tag = 'output window, operand 0, single buffered']
    #allocation3 [shape = 's32[1]{0}', space=sflag, size = 0x4, scoped, tag = 'scoped memory for tpu_custom_call.1']
    %14 = vsyncpa [#allocation3], 0
    // Predicated region
    $region2: #{tpu_custom_call.1} parent=1 // pred_check
      _
    $region3: #{tpu_custom_call.1} parent=1 // pred_check_branch
      %16 = sbr.rel (0) target = $region5
    $region4: #{tpu_custom_call.1} parent=1 // pred_region
      _
    $region5: #{tpu_custom_call.1} parent=1 // pred_fallthru
      _
    // Predicated region
    $region6: #{tpu_custom_call.1} parent=1 // pred_check
      _
    $region7: #{tpu_custom_call.1} parent=1 // pred_check_branch
      %18 = sbr.rel (0) target = $region9
    $region8: #{tpu_custom_call.1} parent=1 // pred_region
      _
    $region9: #{tpu_custom_call.1} parent=1 // pred_fallthru
      _
    // Predicated region
    $region10: #{tpu_custom_call.1} parent=1 // pred_check
      _
    $region11: #{tpu_custom_call.1} parent=1 // pred_check_branch
      %20 = sbr.rel (0) target = $region13
    $region12: #{tpu_custom_call.1} parent=1 // pred_region
      _
    $region13: #{tpu_custom_call.1} parent=1 // pred_fallthru
      _
    // Predicated region
    $region14: #{tpu_custom_call.1} parent=1 // pred_check
      _
    $region15: #{tpu_custom_call.1} parent=1 // pred_check_branch
      %22 = sbr.rel (0) target = $region17
    $region16: #{tpu_custom_call.1} parent=1 // pred_region
      _
    $region17: #{tpu_custom_call.1} parent=1 // pred_fallthru
      _
    // Predicated region
    $region18: #{tpu_custom_call.1} parent=1 // pred_check
      _
    $region19: #{tpu_custom_call.1} parent=1 // pred_check_branch
      %24 = sbr.rel (0) target = $region21
    $region20: #{tpu_custom_call.1} parent=1 // pred_region
      _
    $region21: #{tpu_custom_call.1} parent=1 // pred_fallthru
      _
    // Predicated region
    $region22: #{tpu_custom_call.1} parent=1 // pred_check
      _
    $region23: #{tpu_custom_call.1} parent=1 // pred_check_branch
      %26 = sbr.rel (0) target = $region25
    $region24: #{tpu_custom_call.1} parent=1 // pred_region
      _
    $region25: #{tpu_custom_call.1} parent=1 // pred_fallthru
      _
    // Predicated region
    $region26: #{tpu_custom_call.1} parent=1 // pred_check
      _
    $region27: #{tpu_custom_call.1} parent=1 // pred_check_branch
      %28 = sbr.rel (0) target = $region29
    $region28: #{tpu_custom_call.1} parent=1 // pred_region
      _
    $region29: #{tpu_custom_call.1} parent=1 // pred_fallthru
      _
    // Predicated region
    $region30: #{tpu_custom_call.1} parent=1 // pred_check
      _
    $region31: #{tpu_custom_call.1} parent=1 // pred_check_branch
      %30 = sbr.rel (0) target = $region33
    $region32: #{tpu_custom_call.1} parent=1 // pred_region
      _
    $region33: #{tpu_custom_call.1} parent=1 // pred_fallthru
      _
    // Predicated region
    $region34: #{tpu_custom_call.1} parent=1 // pred_check
      _
    $region35: #{tpu_custom_call.1} parent=1 // pred_check_branch
      %32 = sbr.rel (0) target = $region37
    $region36: #{tpu_custom_call.1} parent=1 // pred_region
      _
    $region37: #{tpu_custom_call.1} parent=1 // pred_fallthru
      _
    %v34 = vld [vmem:[%s0] sm:$0xf]
    %v35 = vld [vmem:[%s0 + $0x4] sm:$0xf]
    %v36 = vld [vmem:[%s1] sm:$0xf]
    %v37 = vld [vmem:[%s1 + $0x4] sm:$0xf]
    %v38 = vld [vmem:[%s1 + $0x8] sm:$0xf]
    %v39 = vld [vmem:[%s2] sm:$0x1]
    %v41 = vperm.slane %v39, 0
    %v45 = vunpack.c.l.b16 %v34
    %v46 = vunpack.c.l.b16 %v35
    %v47 = vpack.c.b16 %v46, %v45
    %v51 = vunpack.c.l.b16 %v36
    %v52 = vunpack.c.l.b16 %v37
    %v53 = vunpack.c.l.b16 %v38
    %v54 = vpack.c.b16 %v52, %v51
    %v55 = vpack.c.b16 %v53, %v53
    %vm57 = vcmask 195584
    %v59 = vsel %vm57, %v47, 0
    %vm61 = vcmask 1043456
    %v63 = vsel %vm61, %v55, 0
    %65 = vmatpush.bf16.msra.mxu0 0
    %66 = vmatpush.bf16.msra.mxu0 0
    %67 = vmatpush.bf16.msra.mxu0 0
    %68 = vmatpush.bf16.msra.mxu0 0
    %69 = vmatpush.bf16.msra.mxu0 0
    %70 = vmatpush.bf16.msra.mxu0 0
    %71 = vmatpush.bf16.msra.mxu0 %v63
    %72 = vmatpush.bf16.msra.mxu0 %v54
    %73 = vmatmul.bf16.gmra.mxu0 %v59
    %v74 = vpop.f32.mrf.mxu0
    %v75 = vadd.f32 %v41, %v74
    %v76 = vpop.f32.mrf.mxu0
    %v77 = vadd.f32 %v41, %v76
    %78 = vdwg.mxu0
    %v79 = vmax.f32 %v75, 0.0
    %v80 = vmax.f32 %v77, 0.0
    %v81 = vpack.c.bf16 %v80, %v79
    %v82 = vld [vmem:[%s3] sm:$0xf]
    %v83 = vld [vmem:[%s3 + $0x4] sm:$0xf]
    %v84 = vld [vmem:[%s3 + $0x8] sm:$0xf]
    %v85 = vld [vmem:[%s3 + $0xc] sm:$0xf]
    %v86 = vld [vmem:[%s3 + $0x10] sm:$0xf]
    %v87 = vld [vmem:[%s3 + $0x14] sm:$0xf]
    %v88 = vld [vmem:[%s3 + $0x18] sm:$0xf]
    %v89 = vld [vmem:[%s3 + $0x1c] sm:$0xf]
    %v90 = vld [vmem:[%s4] sm:$0x1]
    %v92 = vperm.slane %v90, 0
    %v102 = vunpack.c.l.b16 %v82
    %v103 = vunpack.c.l.b16 %v83
    %v104 = vunpack.c.l.b16 %v84
    %v105 = vunpack.c.l.b16 %v85
    %v106 = vunpack.c.l.b16 %v86
    %v107 = vunpack.c.l.b16 %v87
    %v108 = vunpack.c.l.b16 %v88
    %v109 = vunpack.c.l.b16 %v89
    %v110 = vpack.c.b16 %v103, %v102
    %v111 = vpack.c.b16 %v105, %v104
    %v112 = vpack.c.b16 %v107, %v106
    %v113 = vpack.c.b16 %v109, %v108
    %vm118 = vcmask 523264
    %v120 = vsel %vm118, %v81, 0
    %122 = vmatpush.bf16.msra.mxu0 0
    %123 = vmatpush.bf16.msra.mxu0 0
    %124 = vmatpush.bf16.msra.mxu0 0
    %125 = vmatpush.bf16.msra.mxu0 0
    %126 = vmatpush.bf16.msra.mxu0 %v113
    %127 = vmatpush.bf16.msra.mxu0 %v112
    %128 = vmatpush.bf16.msra.mxu0 %v111
    %129 = vmatpush.bf16.msra.mxu0 %v110
    %130 = vmatmul.bf16.gmra.mxu0 %v120
    %v131 = vpop.f32.mrf.mxu0
    %v132 = vadd.f32 %v92, %v131
    %v133 = vpop.f32.mrf.mxu0
    %v134 = vadd.f32 %v92, %v133
    %135 = vdwg.mxu0
    %v136 = vmax.f32 %v132, 0.0
    %v137 = vmax.f32 %v134, 0.0
    %v138 = vpack.c.bf16 %v137, %v136
    %v139 = vld [vmem:[%s5] sm:$0xf]
    %v140 = vld [vmem:[%s5 + $0x4] sm:$0xf]
    %v141 = vld [vmem:[%s5 + $0x8] sm:$0xf]
    %v142 = vld [vmem:[%s5 + $0xc] sm:$0xf]
    %v143 = vld [vmem:[%s5 + $0x10] sm:$0xf]
    %v144 = vld [vmem:[%s5 + $0x14] sm:$0xf]
    %v145 = vld [vmem:[%s5 + $0x18] sm:$0xf]
    %v146 = vld [vmem:[%s5 + $0x1c] sm:$0xf]
    %v147 = vld [vmem:[%s5 + $0x20] sm:$0xf]
    %v148 = vld [vmem:[%s5 + $0x24] sm:$0xf]
    %v149 = vld [vmem:[%s5 + $0x28] sm:$0xf]
    %v150 = vld [vmem:[%s5 + $0x2c] sm:$0xf]
    %v151 = vld [vmem:[%s5 + $0x30] sm:$0xf]
    %v152 = vld [vmem:[%s5 + $0x34] sm:$0xf]
    %v153 = vld [vmem:[%s5 + $0x38] sm:$0xf]
    %v154 = vld [vmem:[%s5 + $0x3c] sm:$0xf]
    %v155 = vld [vmem:[%s6] sm:$0x1]
    %v157 = vperm.slane %v155, 0
    %v175 = vunpack.c.l.b16 %v139
    %v176 = vunpack.c.l.b16 %v140
    %v177 = vunpack.c.l.b16 %v141
    %v178 = vunpack.c.l.b16 %v142
    %v179 = vunpack.c.l.b16 %v143
    %v180 = vunpack.c.l.b16 %v144
    %v181 = vunpack.c.l.b16 %v145
    %v182 = vunpack.c.l.b16 %v146
    %v183 = vunpack.c.l.b16 %v147
    %v184 = vunpack.c.l.b16 %v148
    %v185 = vunpack.c.l.b16 %v149
    %v186 = vunpack.c.l.b16 %v150
    %v187 = vunpack.c.l.b16 %v151
    %v188 = vunpack.c.l.b16 %v152
    %v189 = vunpack.c.l.b16 %v153
    %v190 = vunpack.c.l.b16 %v154
    %v191 = vpack.c.b16 %v176, %v175
    %v192 = vpack.c.b16 %v178, %v177
    %v193 = vpack.c.b16 %v180, %v179
    %v194 = vpack.c.b16 %v182, %v181
    %v195 = vpack.c.b16 %v184, %v183
    %v196 = vpack.c.b16 %v186, %v185
    %v197 = vpack.c.b16 %v188, %v187
    %v198 = vpack.c.b16 %v190, %v189
    %207 = vmatpush.bf16.msra.mxu0 %v198
    %208 = vmatpush.bf16.msra.mxu0 %v197
    %209 = vmatpush.bf16.msra.mxu0 %v196
    %210 = vmatpush.bf16.msra.mxu0 %v195
    %211 = vmatpush.bf16.msra.mxu0 %v194
    %212 = vmatpush.bf16.msra.mxu0 %v193
    %213 = vmatpush.bf16.msra.mxu0 %v192
    %214 = vmatpush.bf16.msra.mxu0 %v191
    %215 = vmatmul.bf16.gmra.mxu0 %v138
    %v216 = vpop.f32.mrf.mxu0
    %v217 = vadd.f32 %v157, %v216
    %v218 = vpop.f32.mrf.mxu0
    %v219 = vadd.f32 %v157, %v218
    %220 = vdwg.mxu0
    %v221 = vmax.f32 %v217, 0.0
    %v222 = vmax.f32 %v219, 0.0
    %v223 = vpack.c.bf16 %v222, %v221
    %v224 = vld [vmem:[%s7] sm:$0xf]
    %v225 = vld [vmem:[%s7 + $0x4] sm:$0xf]
    %v226 = vld [vmem:[%s7 + $0x8] sm:$0xf]
    %v227 = vld [vmem:[%s7 + $0xc] sm:$0xf]
    %v228 = vld [vmem:[%s7 + $0x10] sm:$0xf]
    %v229 = vld [vmem:[%s7 + $0x14] sm:$0xf]
    %v230 = vld [vmem:[%s7 + $0x18] sm:$0xf]
    %v231 = vld [vmem:[%s7 + $0x1c] sm:$0xf]
    %v232 = vld [vmem:[%s8] sm:$0x1]
    %v234 = vperm.slane %v232, 0
    %v244 = vunpack.c.l.b16 %v224
    %v245 = vunpack.c.l.b16 %v225
    %v246 = vunpack.c.l.b16 %v226
    %v247 = vunpack.c.l.b16 %v227
    %v248 = vunpack.c.l.b16 %v228
    %v249 = vunpack.c.l.b16 %v229
    %v250 = vunpack.c.l.b16 %v230
    %v251 = vunpack.c.l.b16 %v231
    %v252 = vpack.c.b16 %v245, %v244
    %v253 = vpack.c.b16 %v247, %v246
    %v254 = vpack.c.b16 %v249, %v248
    %v255 = vpack.c.b16 %v251, %v250
    %v261 = vsel %vm118, %v223, 0
    %263 = vmatpush.bf16.msra.mxu0 0
    %264 = vmatpush.bf16.msra.mxu0 0
    %265 = vmatpush.bf16.msra.mxu0 0
    %266 = vmatpush.bf16.msra.mxu0 0
    %267 = vmatpush.bf16.msra.mxu0 %v255
    %268 = vmatpush.bf16.msra.mxu0 %v254
    %269 = vmatpush.bf16.msra.mxu0 %v253
    %270 = vmatpush.bf16.msra.mxu0 %v252
    %271 = vmatmul.bf16.gmra.mxu0 %v261
    %v272 = vpop.f32.mrf.mxu0
    %v273 = vadd.f32 %v234, %v272
    %v274 = vpop.f32.mrf.mxu0
    %v275 = vadd.f32 %v234, %v274
    %276 = vdwg.mxu0
    %vm277 = vcmask 130048
    %278 = vst.msk [vmem:[#allocation2] sm:$0xff] %vm277, %v273
    %279 = vst.msk [vmem:[#allocation2 + $0x8] sm:$0xff] %vm277, %v275
    // Predicated region
    $region38: #{tpu_custom_call.1} parent=1 // pred_check
      _
    $region39: #{tpu_custom_call.1} parent=1 // pred_check_branch
      %281 = sbr.rel (0) target = $region41
    $region40: #{tpu_custom_call.1} parent=1 // pred_region
      %283 = vsyncadd [#allocation3], 0
      %s284 = sshll.u32 [#allocation2], 4
      %s285 = int_to_ptr.vmem [resolvable:$true] %s284
      %s286 = sshll.u32 %s9, 4
      %s287 = int_to_ptr.hbm [resolvable:$true] %s286
      %292 = dma.vmem_to_hbm [thread:$0]  %s285, 256, %s287, [#allocation3], 128, 128, 8
    $region41: #{tpu_custom_call.1} parent=1 // pred_fallthru
      _
    // Predicated region
    $region42: #{tpu_custom_call.1} parent=1 // pred_check
      _
    $region43: #{tpu_custom_call.1} parent=1 // pred_check_branch
      %294 = sbr.rel (0) target = $region45
    $region44: #{tpu_custom_call.1} parent=1 // pred_region
      %296 = dma.done [#allocation3], 256
    $region45: #{tpu_custom_call.1} parent=1 // pred_fallthru
      _
    %297 = vsyncpa [#allocation3], 1

</llo_original>
